<compile_context>
chip_gen: v7x
topology: tpu7x:2x2x1
jax: 0.10.0
libtpu: 0.0.40
codegen_flags: <defaults>
</compile_context>

<pallas_src>
import jax
import jax.numpy as jnp
from jax.experimental import pallas as pl
from jax.experimental.pallas import tpu as pltpu

EMB = 50                 # embedding_size from the module
BERT_DIM = 64            # bert_embeddings.shape[1] (synthetic)
CONTENT_DIM = 4 * EMB    # packed [news, cat, sub, ent] stream width

# Batch tile. ~630 B/row of bf16 activations -> ~5 MiB per 8192-row tile per stream
# (double buffered, 128-lane padded) which together with f32 intermediates stays well
# inside the 48 MiB VMEM budget below (v7x has 64 MiB / TC).
_TILE_B = 8192


def _round_up(x, m):
    return (x + m - 1) // m * m


def _content_kernel(user_ref, content_ref, bert_ref,
                    wb_ref, bb_ref, wc4_ref, wcb_ref, bc_ref, out_ref):
    f32 = jnp.float32
    bf16 = jnp.bfloat16

    # --- news_bert_transform + sigmoid ------------------------------------
    # bf16 x bf16 -> f32 is the native MXU path on v5e/v6e/v7x; bias + sigmoid in f32.
    bert = jnp.dot(bert_ref[...], wb_ref[...],
                   preferred_element_type=f32) + bb_ref[...]
    bert = jax.nn.sigmoid(bert)

    # --- news_content_transform on concat([news, bert, cat, sub, ent]) ----
    #   concat(...) @ Wc == packed[news,cat,sub,ent] @ Wc4  +  bert @ Wc_bert
    z = jnp.dot(content_ref[...], wc4_ref[...], preferred_element_type=f32)
    z = z + jnp.dot(bert.astype(bf16), wcb_ref[...], preferred_element_type=f32)
    news_emb = jax.nn.sigmoid(z + bc_ref[...])

    # --- sum(user * news, axis=1) then sigmoid -----------------------------
    dot = jnp.sum(user_ref[...].astype(f32) * news_emb, axis=1, keepdims=True)
    out_ref[...] = jax.nn.sigmoid(dot)


def content_based_forward(params, users, items, categories, subcategories, entities,
                          *, tile_b=_TILE_B):
    """Pallas-backed equivalent of ContentBasedModel.forward."""
    bf16 = jnp.bfloat16

    # Embedding lookups (glue, plain JAX gathers). Tables are bf16 -> half the HBM
    # bytes into the kernel. The 4-way concat is expected to fuse with the gathers
    # into a single [B, 200] write (check HLO if this path ever dominates).
    user_e = params["user_emb"][users]                       # [B, EMB]       bf16
    bert_e = params["bert_emb"][items]                       # [B, BERT_DIM]  bf16
    content_e = jnp.concatenate(                             # [B, 4*EMB]     bf16
        [params["news_emb"][items],
         params["cat_emb"][categories],
         params["subcat_emb"][subcategories],
         params["entity_emb"][entities[:, 0]]], axis=1)      # module uses entities[:,0] only

    B = users.shape[0]
    # Tile size: big for low per-step overhead, but clamped so large batches still
    # produce >= 4 grid tiles (v7x megacore only splits a "parallel" axis with >1 tile).
    tb = min(tile_b, _round_up(pl.cdiv(B, 4), 16))
    num_tiles = pl.cdiv(B, tb)

    # Split w_content [250, 50] to match the packed layout.
    # Row blocks: [0:50]=news, [50:100]=bert, [100:150]=cat, [150:200]=sub, [200:250]=ent
    wc = params["w_content"]
    wc4 = jnp.concatenate([wc[0:EMB], wc[2 * EMB:]], axis=0)  # [200, 50] (news,cat,sub,ent)
    wcb = wc[EMB:2 * EMB]                                     # [50, 50]  (bert rows)

    # Linear weights fed to the MXU as bf16 (f32 accumulation inside the kernel);
    # biases stay f32.
    wb_bf, wc4_bf, wcb_bf = (params["w_bert"].astype(bf16),
                             wc4.astype(bf16), wcb.astype(bf16))

    def row_spec(cols):
        return pl.BlockSpec((tb, cols), lambda i: (i, 0))

    def const_spec(shape):
        return pl.BlockSpec(shape, lambda i: (0,) * len(shape))

    # Advisory cost for XLA's scheduler around the custom call.
    flops_per_row = 2 * (BERT_DIM * EMB + CONTENT_DIM * EMB + EMB * EMB) + 2 * EMB
    bytes_per_row = 2 * (EMB + CONTENT_DIM + BERT_DIM) + 4
    weight_bytes = 2 * (BERT_DIM * EMB + CONTENT_DIM * EMB + EMB * EMB) + 4 * (2 * EMB)
    cost = pl.CostEstimate(flops=flops_per_row * B,
                           transcendentals=(2 * EMB + 1) * B,
                           bytes_accessed=bytes_per_row * B + weight_bytes)

    out = pl.pallas_call(
        _content_kernel,
        grid=(num_tiles,),
        in_specs=[
            row_spec(EMB),                   # user_e
            row_spec(CONTENT_DIM),           # packed [news, cat, sub, ent]
            row_spec(BERT_DIM),              # bert_e
            const_spec((BERT_DIM, EMB)),     # W_bert  (bf16, resident across grid)
            const_spec((1, EMB)),            # b_bert  (f32)
            const_spec((CONTENT_DIM, EMB)),  # W_content packed rows (bf16)
            const_spec((EMB, EMB)),          # W_content bert rows   (bf16)
            const_spec((1, EMB)),            # b_content (f32)
        ],
        # (tb, 1) output is lane-sparse but tiny (4 B/row); accepted per review.
        out_specs=pl.BlockSpec((tb, 1), lambda i: (i, 0)),
        out_shape=jax.ShapeDtypeStruct((B, 1), jnp.float32),
        compiler_params=pltpu.CompilerParams(
            dimension_semantics=("parallel",),      # batch tiles shard across TCs (v7x)
            vmem_limit_bytes=48 * 1024 * 1024),
        cost_estimate=cost,
    )(user_e, content_e, bert_e,
      wb_bf, params["b_bert"], wc4_bf, wcb_bf, params["b_content"])

    return out[:, 0]   # [B] sigmoid scores


def _ref_forward(params, users, items, categories, subcategories, entities):
    """Pure-JAX reference mirroring the kernel's mixed precision
    (bf16 MXU operands, f32 accumulation / biases / sigmoids)."""
    f32, bf16 = jnp.float32, jnp.bfloat16
    wb = params["w_bert"].astype(bf16).astype(f32)
    wc = params["w_content"].astype(bf16).astype(f32)
    user_e = params["user_emb"][users].astype(f32)
    bert = jax.nn.sigmoid(params["bert_emb"][items].astype(f32) @ wb
                          + params["b_bert"][0])
    bert = bert.astype(bf16).astype(f32)   # kernel feeds the sigmoid output to the MXU as bf16
    concat = jnp.concatenate(
        [params["news_emb"][items].astype(f32), bert,
         params["cat_emb"][categories].astype(f32),
         params["subcat_emb"][subcategories].astype(f32),
         params["entity_emb"][entities[:, 0]].astype(f32)], axis=1)
    news = jax.nn.sigmoid(concat @ wc + params["b_content"][0])
    return jax.nn.sigmoid(jnp.sum(user_e * news, axis=1))


def init_params(key, num_users, num_news, num_categories, num_subcategories, num_entities):
    ks = jax.random.split(key, 9)

    def n(k, shape, dtype=jnp.float32, s=0.1):
        return (s * jax.random.normal(k, shape)).astype(dtype)

    bf = jnp.bfloat16
    return {
        # Embedding tables in bf16 (halves gather + kernel-input HBM traffic).
        # TODO(synk): on v7x, fp8(e4m3) tables would halve HBM bytes again (MXU takes fp8 natively).
        "user_emb":   n(ks[0], (num_users, EMB), bf),
        "news_emb":   n(ks[1], (num_news, EMB), bf),
        "cat_emb":    n(ks[2], (num_categories, EMB), bf),
        "subcat_emb": n(ks[3], (num_subcategories, EMB), bf),
        "entity_emb": n(ks[4], (num_entities, EMB), bf),
        "bert_emb":   n(ks[5], (num_news, BERT_DIM), bf),     # frozen pretrained (synthetic)
        # Linear weights kept f32 here (master copy); cast to bf16 at the kernel boundary.
        "w_bert":     n(ks[6], (BERT_DIM, EMB)),
        "b_bert":     jnp.zeros((1, EMB), jnp.float32),
        "w_content":  n(ks[7], (5 * EMB, EMB)),
        "b_content":  n(ks[8], (1, EMB)),
    }


if __name__ == "__main__":
    key = jax.random.PRNGKey(0)
    kp, k1, k2, k3, k4, k5 = jax.random.split(key, 6)

    num_users, num_news = 10, 12
    num_categories, num_subcategories, num_entities = 5, 7, 9
    B, N_ENT_COLS = 8, 3

    params = init_params(kp, num_users, num_news, num_categories,
                         num_subcategories, num_entities)

    users         = jax.random.randint(k1, (B,), 0, num_users)
    items         = jax.random.randint(k2, (B,), 0, num_news)
    categories    = jax.random.randint(k3, (B,), 0, num_categories)
    subcategories = jax.random.randint(k4, (B,), 0, num_subcategories)
    # NOTE: the module (and hence this kernel) only uses entities[:, 0].
    entities      = jax.random.randint(k5, (B, N_ENT_COLS), 0, num_entities)

    out = content_based_forward(params, users, items, categories, subcategories, entities)
    out = jax.block_until_ready(out)

    ref = _ref_forward(params, users, items, categories, subcategories, entities)
    assert out.shape == (B,)
    assert jnp.allclose(out, ref, atol=1e-3), (out, ref)

    print("KERNEL_OK")
</pallas_src>

<mosaic_0001>
module attributes {stable_mosaic.version = 11 : i64} {
  func.func @_content_kernel(%arg0: i32, %arg1: memref<16x50xbf16, #tpu.memory_space<vmem>>, %arg2: memref<16x200xbf16, #tpu.memory_space<vmem>>, %arg3: memref<16x64xbf16, #tpu.memory_space<vmem>>, %arg4: memref<64x50xbf16, #tpu.memory_space<vmem>>, %arg5: memref<1x50xf32, #tpu.memory_space<vmem>>, %arg6: memref<200x50xbf16, #tpu.memory_space<vmem>>, %arg7: memref<50x50xbf16, #tpu.memory_space<vmem>>, %arg8: memref<1x50xf32, #tpu.memory_space<vmem>>, %arg9: memref<16x1xf32, #tpu.memory_space<vmem>>) attributes {dimension_semantics = [#tpu.dimension_semantics<parallel>], iteration_bounds = array<i64: 1>, scalar_prefetch = 0 : i64, scratch_operands = 0 : i64, tpu.core_type = #tpu.core_type<tc>, window_params = [{transform_indices = @transform_0, window_bounds = array<i64: 16, 50>}, {transform_indices = @transform_1, window_bounds = array<i64: 16, 200>}, {transform_indices = @transform_2, window_bounds = array<i64: 16, 64>}, {pipeline_mode = #tpu.pipeline_mode<synchronous>, transform_indices = @transform_3, window_bounds = array<i64: 64, 50>}, {pipeline_mode = #tpu.pipeline_mode<synchronous>, transform_indices = @transform_4, window_bounds = array<i64: 1, 50>}, {pipeline_mode = #tpu.pipeline_mode<synchronous>, transform_indices = @transform_5, window_bounds = array<i64: 200, 50>}, {pipeline_mode = #tpu.pipeline_mode<synchronous>, transform_indices = @transform_6, window_bounds = array<i64: 50, 50>}, {pipeline_mode = #tpu.pipeline_mode<synchronous>, transform_indices = @transform_7, window_bounds = array<i64: 1, 50>}, {transform_indices = @transform_8, window_bounds = array<i64: 16, 1>}]} {
    %c0 = arith.constant 0 : index
    %c0_0 = arith.constant 0 : index
    %0 = vector.load %arg3[%c0, %c0_0] : memref<16x64xbf16, #tpu.memory_space<vmem>>, vector<16x64xbf16>
    %c0_1 = arith.constant 0 : index
    %c0_2 = arith.constant 0 : index
    %1 = vector.load %arg4[%c0_1, %c0_2] : memref<64x50xbf16, #tpu.memory_space<vmem>>, vector<64x50xbf16>
    %cst = arith.constant dense<0.000000e+00> : vector<16x50xf32>
    %2 = tpu.matmul %0, %1, %cst {dimension_numbers = #tpu.dot_dimension_numbers<[1], [0], [0], [1], [0, 0, 1, 1], [], []>} : vector<16x64xbf16>, vector<64x50xbf16>, vector<16x50xf32> -> vector<16x50xf32>
    %c0_3 = arith.constant 0 : index
    %c0_4 = arith.constant 0 : index
    %3 = vector.load %arg5[%c0_3, %c0_4] : memref<1x50xf32, #tpu.memory_space<vmem>>, vector<1x50xf32>
    %4 = vector.broadcast %3 : vector<1x50xf32> to vector<16x50xf32>
    %5 = arith.addf %2, %4 : vector<16x50xf32>
    %6 = arith.negf %5 : vector<16x50xf32>
    %7 = math.exp %6 : vector<16x50xf32>
    %cst_5 = arith.constant 1.000000e+00 : f32
    %8 = vector.broadcast %cst_5 : f32 to vector<16x50xf32>
    %9 = arith.addf %8, %7 : vector<16x50xf32>
    %10 = arith.divf %8, %9 : vector<16x50xf32>
    %c0_6 = arith.constant 0 : index
    %c0_7 = arith.constant 0 : index
    %11 = vector.load %arg2[%c0_6, %c0_7] : memref<16x200xbf16, #tpu.memory_space<vmem>>, vector<16x200xbf16>
    %c0_8 = arith.constant 0 : index
    %c0_9 = arith.constant 0 : index
    %12 = vector.load %arg6[%c0_8, %c0_9] : memref<200x50xbf16, #tpu.memory_space<vmem>>, vector<200x50xbf16>
    %cst_10 = arith.constant dense<0.000000e+00> : vector<16x50xf32>
    %13 = tpu.matmul %11, %12, %cst_10 {dimension_numbers = #tpu.dot_dimension_numbers<[1], [0], [0], [1], [0, 0, 1, 1], [], []>} : vector<16x200xbf16>, vector<200x50xbf16>, vector<16x50xf32> -> vector<16x50xf32>
    %14 = arith.truncf %10 : vector<16x50xf32> to vector<16x50xbf16>
    %c0_11 = arith.constant 0 : index
    %c0_12 = arith.constant 0 : index
    %15 = vector.load %arg7[%c0_11, %c0_12] : memref<50x50xbf16, #tpu.memory_space<vmem>>, vector<50x50xbf16>
    %cst_13 = arith.constant dense<0.000000e+00> : vector<16x50xf32>
    %16 = tpu.matmul %14, %15, %cst_13 {dimension_numbers = #tpu.dot_dimension_numbers<[1], [0], [0], [1], [0, 0, 1, 1], [], []>} : vector<16x50xbf16>, vector<50x50xbf16>, vector<16x50xf32> -> vector<16x50xf32>
    %17 = arith.addf %13, %16 : vector<16x50xf32>
    %c0_14 = arith.constant 0 : index
    %c0_15 = arith.constant 0 : index
    %18 = vector.load %arg8[%c0_14, %c0_15] : memref<1x50xf32, #tpu.memory_space<vmem>>, vector<1x50xf32>
    %19 = vector.broadcast %18 : vector<1x50xf32> to vector<16x50xf32>
    %20 = arith.addf %17, %19 : vector<16x50xf32>
    %21 = arith.negf %20 : vector<16x50xf32>
    %22 = math.exp %21 : vector<16x50xf32>
    %cst_16 = arith.constant 1.000000e+00 : f32
    %23 = vector.broadcast %cst_16 : f32 to vector<16x50xf32>
    %24 = arith.addf %23, %22 : vector<16x50xf32>
    %25 = arith.divf %23, %24 : vector<16x50xf32>
    %c0_17 = arith.constant 0 : index
    %c0_18 = arith.constant 0 : index
    %26 = vector.load %arg1[%c0_17, %c0_18] : memref<16x50xbf16, #tpu.memory_space<vmem>>, vector<16x50xbf16>
    %27 = arith.extf %26 : vector<16x50xbf16> to vector<16x50xf32>
    %28 = arith.mulf %27, %25 : vector<16x50xf32>
    %cst_19 = arith.constant dense<0.000000e+00> : vector<16xf32>
    %29 = vector.multi_reduction <add>, %28, %cst_19 [1] : vector<16x50xf32> to vector<16xf32>
    %30 = vector.shape_cast %29 : vector<16xf32> to vector<16x1xf32>
    %31 = arith.negf %30 : vector<16x1xf32>
    %32 = math.exp %31 : vector<16x1xf32>
    %cst_20 = arith.constant 1.000000e+00 : f32
    %33 = vector.broadcast %cst_20 : f32 to vector<16x1xf32>
    %34 = arith.addf %33, %32 : vector<16x1xf32>
    %35 = arith.divf %33, %34 : vector<16x1xf32>
    %c0_21 = arith.constant 0 : index
    %c0_22 = arith.constant 0 : index
    %36 = vector.load %arg9[%c0_21, %c0_22] : memref<16x1xf32, #tpu.memory_space<vmem>>, vector<16x1xf32>
    tpu.vector_store %arg9[%c0_21, %c0_22], %35 {strides = array<i32>} : memref<16x1xf32, #tpu.memory_space<vmem>>, vector<16x1xf32>,
    return
  }
  func.func @transform_0(%arg0: i32) -> (i32, i32) {
    %c0_i32 = arith.constant 0 : i32
    %c0_i32_0 = arith.constant 0 : i32
    return %arg0, %c0_i32 : i32, i32
  }
  func.func @transform_1(%arg0: i32) -> (i32, i32) {
    %c0_i32 = arith.constant 0 : i32
    %c0_i32_0 = arith.constant 0 : i32
    return %arg0, %c0_i32 : i32, i32
  }
  func.func @transform_2(%arg0: i32) -> (i32, i32) {
    %c0_i32 = arith.constant 0 : i32
    %c0_i32_0 = arith.constant 0 : i32
    return %arg0, %c0_i32 : i32, i32
  }
  func.func @transform_3(%arg0: i32) -> (i32, i32) {
    %c0_i32 = arith.constant 0 : i32
    %c0_i32_0 = arith.constant 0 : i32
    %c0_i32_1 = arith.constant 0 : i32
    return %c0_i32, %c0_i32_0 : i32, i32
  }
  func.func @transform_4(%arg0: i32) -> (i32, i32) {
    %c0_i32 = arith.constant 0 : i32
    %c0_i32_0 = arith.constant 0 : i32
    %c0_i32_1 = arith.constant 0 : i32
    return %c0_i32, %c0_i32_0 : i32, i32
  }
  func.func @transform_5(%arg0: i32) -> (i32, i32) {
    %c0_i32 = arith.constant 0 : i32
    %c0_i32_0 = arith.constant 0 : i32
    %c0_i32_1 = arith.constant 0 : i32
    return %c0_i32, %c0_i32_0 : i32, i32
  }
  func.func @transform_6(%arg0: i32) -> (i32, i32) {
    %c0_i32 = arith.constant 0 : i32
    %c0_i32_0 = arith.constant 0 : i32
    %c0_i32_1 = arith.constant 0 : i32
    return %c0_i32, %c0_i32_0 : i32, i32
  }
  func.func @transform_7(%arg0: i32) -> (i32, i32) {
    %c0_i32 = arith.constant 0 : i32
    %c0_i32_0 = arith.constant 0 : i32
    %c0_i32_1 = arith.constant 0 : i32
    return %c0_i32, %c0_i32_0 : i32, i32
  }
  func.func @transform_8(%arg0: i32) -> (i32, i32) {
    %c0_i32 = arith.constant 0 : i32
    %c0_i32_0 = arith.constant 0 : i32
    return %arg0, %c0_i32 : i32, i32
  }
}

</mosaic_0001>

<llo_original>
// kernel: tpu_custom_call.1
$region0: #{tpu_custom_call.1}
  #allocation0 [shape = 'u32[]', space=smem, size = 0x4, offset = 0x4, fixed_abs, tag = 'smem constant byte address 0x4 - core index']
  #allocation1 [shape = 'u32[144,128]{1,0:T(1,128)}', space=vmem, size = 0x12000, scoped, tag = 'internal scratch']
  %s0 = inlined_call_operand.vmem [shape: bf16[8,50], index: 0, kind: input, shape index: {}]
  %s1 = inlined_call_operand.vmem [shape: bf16[8,200], index: 1, kind: input, shape index: {}]
  %s2 = inlined_call_operand.vmem [shape: bf16[8,64], index: 2, kind: input, shape index: {}]
  %s3 = inlined_call_operand.vmem [shape: bf16[64,50], index: 3, kind: input, shape index: {}]
  %s4 = inlined_call_operand.vmem [shape: f32[1,50], index: 4, kind: input, shape index: {}]
  %s5 = inlined_call_operand.vmem [shape: bf16[200,50], index: 5, kind: input, shape index: {}]
  %s6 = inlined_call_operand.vmem [shape: bf16[50,50], index: 6, kind: input, shape index: {}]
  %s7 = inlined_call_operand.vmem [shape: f32[1,50], index: 7, kind: input, shape index: {}]
  %s8 = inlined_call_operand.vmem [shape: f32[8,1], index: 8, kind: output, shape index: {}]
  %s9 = sld [smem:[#allocation0]]
  $region76: #{tpu_custom_call.1} parent=0
    _
  %s11 = ssub.s32 1, %s9
  %s12 = scalar_select 0, %s11, %s9
  $region1: #{tpu_custom_call.1} parent=0
    #allocation2 [shape = 'u8[8192]{0}', space=vmem, size = 0x2000, scoped, tag = 'output window, operand 0, single buffered']
    // Predicated region
    $region2: #{tpu_custom_call.1} parent=1 // pred_check
      _
    $region3: #{tpu_custom_call.1} parent=1 // pred_check_branch
      %14 = sbr.rel (0) target = $region5
    $region4: #{tpu_custom_call.1} parent=1 // pred_region
      _
    $region5: #{tpu_custom_call.1} parent=1 // pred_fallthru
      _
    // Predicated region
    $region6: #{tpu_custom_call.1} parent=1 // pred_check
      _
    $region7: #{tpu_custom_call.1} parent=1 // pred_check_branch
      %16 = sbr.rel (0) target = $region9
    $region8: #{tpu_custom_call.1} parent=1 // pred_region
      _
    $region9: #{tpu_custom_call.1} parent=1 // pred_fallthru
      _
    // Predicated region
    $region10: #{tpu_custom_call.1} parent=1 // pred_check
      _
    $region11: #{tpu_custom_call.1} parent=1 // pred_check_branch
      %18 = sbr.rel (0) target = $region13
    $region12: #{tpu_custom_call.1} parent=1 // pred_region
      _
    $region13: #{tpu_custom_call.1} parent=1 // pred_fallthru
      _
    // Predicated region
    $region14: #{tpu_custom_call.1} parent=1 // pred_check
      _
    $region15: #{tpu_custom_call.1} parent=1 // pred_check_branch
      %20 = sbr.rel (0) target = $region17
    $region16: #{tpu_custom_call.1} parent=1 // pred_region
      _
    $region17: #{tpu_custom_call.1} parent=1 // pred_fallthru
      _
    // Predicated region
    $region18: #{tpu_custom_call.1} parent=1 // pred_check
      _
    $region19: #{tpu_custom_call.1} parent=1 // pred_check_branch
      %22 = sbr.rel (0) target = $region21
    $region20: #{tpu_custom_call.1} parent=1 // pred_region
      _
    $region21: #{tpu_custom_call.1} parent=1 // pred_fallthru
      _
    // Predicated region
    $region22: #{tpu_custom_call.1} parent=1 // pred_check
      _
    $region23: #{tpu_custom_call.1} parent=1 // pred_check_branch
      %24 = sbr.rel (0) target = $region25
    $region24: #{tpu_custom_call.1} parent=1 // pred_region
      _
    $region25: #{tpu_custom_call.1} parent=1 // pred_fallthru
      _
    // Predicated region
    $region26: #{tpu_custom_call.1} parent=1 // pred_check
      _
    $region27: #{tpu_custom_call.1} parent=1 // pred_check_branch
      %26 = sbr.rel (0) target = $region29
    $region28: #{tpu_custom_call.1} parent=1 // pred_region
      _
    $region29: #{tpu_custom_call.1} parent=1 // pred_fallthru
      _
    // Predicated region
    $region30: #{tpu_custom_call.1} parent=1 // pred_check
      _
    $region31: #{tpu_custom_call.1} parent=1 // pred_check_branch
      %28 = sbr.rel (0) target = $region33
    $region32: #{tpu_custom_call.1} parent=1 // pred_region
      _
    $region33: #{tpu_custom_call.1} parent=1 // pred_fallthru
      _
    %v30 = vld [vmem:[%s2] sm:$0xf]
    %v31 = vld [vmem:[%s2 + $0x4] sm:$0xf]
    %v32 = vld [vmem:[%s3] sm:$0xf]
    %v33 = vld [vmem:[%s3 + $0x4] sm:$0xf]
    %v34 = vld [vmem:[%s3 + $0x8] sm:$0xf]
    %v35 = vld [vmem:[%s3 + $0xc] sm:$0xf]
    %v36 = vld [vmem:[%s3 + $0x10] sm:$0xf]
    %v37 = vld [vmem:[%s3 + $0x14] sm:$0xf]
    %v38 = vld [vmem:[%s3 + $0x18] sm:$0xf]
    %v39 = vld [vmem:[%s3 + $0x1c] sm:$0xf]
    %v40 = vld [vmem:[%s4] sm:$0x1]
    %v42 = vlaneseq
    %v43 = vshrl.u32 %v42, 7
    %v44 = vsub.s32 0, %v43
    %v45 = vrot.slane %v40, %v44
    %v49 = vunpack.c.l.b16 %v30
    %v50 = vunpack.c.l.b16 %v31
    %v51 = vpack.c.b16 %v50, %v49
    %v60 = vunpack.c.l.b16 %v32
    %v61 = vunpack.c.l.b16 %v33
    %v62 = vunpack.c.l.b16 %v34
    %v63 = vunpack.c.l.b16 %v35
    %v64 = vunpack.c.l.b16 %v36
    %v65 = vunpack.c.l.b16 %v37
    %v66 = vunpack.c.l.b16 %v38
    %v67 = vunpack.c.l.b16 %v39
    %v68 = vpack.c.b16 %v61, %v60
    %v69 = vpack.c.b16 %v63, %v62
    %v70 = vpack.c.b16 %v65, %v64
    %v71 = vpack.c.b16 %v67, %v66
    %vm76 = vcmask 523264
    %v78 = vsel %vm76, %v51, 0
    %80 = vmatprep.subr.bf16.mxu0 0
    %81 = vmatpush1.bf16.msra.mxu0 %v68
    %82 = vmatprep.subr.bf16.mxu0 0
    %83 = vmatpush1.bf16.msra.mxu0 %v69
    %84 = vmatprep.subr.bf16.mxu0 0
    %85 = vmatpush1.bf16.msra.mxu0 %v70
    %86 = vmatprep.subr.bf16.mxu0 0
    %87 = vmatpush1.bf16.msra.mxu0 %v71
    %88 = vmatprep.subr.bf16.mxu0 0
    %89 = vmatpush1.bf16.msra.mxu0 0
    %90 = vmatprep.subr.bf16.mxu0 0
    %91 = vmatpush1.bf16.msra.mxu0 0
    %92 = vmatprep.subr.bf16.mxu0 0
    %93 = vmatpush1.bf16.msra.mxu0 0
    %94 = vmatprep.subr.bf16.mxu0 0
    %95 = vmatpush1.bf16.msra.mxu0 0
    %96 = vmatprep.subr.bf16.mxu0 0
    %97 = vmatpush1.bf16.msra.mxu0 0
    %98 = vmatprep.subr.bf16.mxu0 0
    %99 = vmatpush1.bf16.msra.mxu0 0
    %100 = vmatprep.subr.bf16.mxu0 0
    %101 = vmatpush1.bf16.msra.mxu0 0
    %102 = vmatprep.subr.bf16.mxu0 0
    %103 = vmatpush1.bf16.msra.mxu0 0
    %104 = vmatprep.subr.bf16.mxu0 0
    %105 = vmatpush1.bf16.msra.mxu0 0
    %106 = vmatprep.subr.bf16.mxu0 0
    %107 = vmatpush1.bf16.msra.mxu0 0
    %108 = vmatprep.subr.bf16.mxu0 0
    %109 = vmatpush1.bf16.msra.mxu0 0
    %110 = vmatprep.subr.bf16.mxu0 0
    %111 = vmatpush1.bf16.msra.mxu0 0
    %112 = vmatprep.mubr.bf16.mxu0 0
    %113 = vmatmul.mubr.bf16.gmra.mrb[0].mxu0 %v78
    %v114 = vpop.f32.mrb[0].mxu0
    %v115 = vadd.f32 %v45, %v114
    %v116 = vpop.f32.mrb[0].mxu0
    %v117 = vpop.f32.mrb[0].mxu0
    %v118 = vadd.f32 %v45, %v117
    %v119 = vpop.f32.mrb[0].mxu0
    %120 = vdwg.mxu0
    %v121 = vxor.u32 %v115, 2147483648
    %v122 = vxor.u32 %v118, 2147483648
    %v123 = vmul.f32 %v121, 1.442695
    %v124 = vpow.pop %v123
    %v125 = vmul.f32 %v122, 1.442695
    %v126 = vpow.pop %v125
    %v127 = vadd.f32 %v124, 1.0
    %v128 = vadd.f32 %v126, 1.0
    %v129 = vrcp.pop %v127
    %v130 = vmul.f32 1.0, %v129
    %v131 = vrcp.pop %v128
    %v132 = vmul.f32 1.0, %v131
    %v133 = vld [vmem:[%s1] sm:$0xff]
    %v134 = vld [vmem:[%s1 + $0x8] sm:$0xff]
    %v135 = vld [vmem:[%s5] sm:$0xf]
    %v136 = vld [vmem:[%s5 + $0x4] sm:$0xf]
    %v137 = vld [vmem:[%s5 + $0x8] sm:$0xf]
    %v138 = vld [vmem:[%s5 + $0xc] sm:$0xf]
    %v139 = vld [vmem:[%s5 + $0x10] sm:$0xf]
    %v140 = vld [vmem:[%s5 + $0x14] sm:$0xf]
    %v141 = vld [vmem:[%s5 + $0x18] sm:$0xf]
    %v142 = vld [vmem:[%s5 + $0x1c] sm:$0xf]
    %v143 = vld [vmem:[%s5 + $0x20] sm:$0xf]
    %v144 = vld [vmem:[%s5 + $0x24] sm:$0xf]
    %v145 = vld [vmem:[%s5 + $0x28] sm:$0xf]
    %v146 = vld [vmem:[%s5 + $0x2c] sm:$0xf]
    %v147 = vld [vmem:[%s5 + $0x30] sm:$0xf]
    %v148 = vld [vmem:[%s5 + $0x34] sm:$0xf]
    %v149 = vld [vmem:[%s5 + $0x38] sm:$0xf]
    %v150 = vld [vmem:[%s5 + $0x3c] sm:$0xf]
    %v151 = vld [vmem:[%s5 + $0x40] sm:$0xf]
    %v152 = vld [vmem:[%s5 + $0x44] sm:$0xf]
    %v153 = vld [vmem:[%s5 + $0x48] sm:$0xf]
    %v154 = vld [vmem:[%s5 + $0x4c] sm:$0xf]
    %v155 = vld [vmem:[%s5 + $0x50] sm:$0xf]
    %v156 = vld [vmem:[%s5 + $0x54] sm:$0xf]
    %v157 = vld [vmem:[%s5 + $0x58] sm:$0xf]
    %v158 = vld [vmem:[%s5 + $0x5c] sm:$0xf]
    %v159 = vld [vmem:[%s5 + $0x60] sm:$0xf]
    %v160 = vpack.c.bf16 %v132, %v130
    %v161 = vld [vmem:[%s6] sm:$0xf]
    %v162 = vld [vmem:[%s6 + $0x4] sm:$0xf]
    %v163 = vld [vmem:[%s6 + $0x8] sm:$0xf]
    %v164 = vld [vmem:[%s6 + $0xc] sm:$0xf]
    %v165 = vld [vmem:[%s6 + $0x10] sm:$0xf]
    %v166 = vld [vmem:[%s6 + $0x14] sm:$0xf]
    %v167 = vld [vmem:[%s6 + $0x18] sm:$0x1]
    %v175 = vunpack.c.l.b16 %v161
    %v176 = vunpack.c.l.b16 %v162
    %v177 = vunpack.c.l.b16 %v163
    %v178 = vunpack.c.l.b16 %v164
    %v179 = vunpack.c.l.b16 %v165
    %v180 = vunpack.c.l.b16 %v166
    %v181 = vunpack.c.l.b16 %v167
    %v182 = vpack.c.b16 %v176, %v175
    %v183 = vpack.c.b16 %v178, %v177
    %v184 = vpack.c.b16 %v180, %v179
    %v185 = vpack.c.b16 %v181, %v181
    %vm189 = vcmask 408576
    %v191 = vsel %vm189, %v160, 0
    %vm193 = vcmask 1040384
    %v195 = vsel %vm193, %v185, 0
    %197 = vmatprep.subr.bf16.mxu0 0
    %198 = vmatpush1.bf16.msra.mxu0 %v182
    %199 = vmatprep.subr.bf16.mxu0 0
    %200 = vmatpush1.bf16.msra.mxu0 %v183
    %201 = vmatprep.subr.bf16.mxu0 0
    %202 = vmatpush1.bf16.msra.mxu0 %v184
    %203 = vmatprep.subr.bf16.mxu0 0
    %204 = vmatpush1.bf16.msra.mxu0 %v195
    %205 = vmatprep.subr.bf16.mxu0 0
    %206 = vmatpush1.bf16.msra.mxu0 0
    %207 = vmatprep.subr.bf16.mxu0 0
    %208 = vmatpush1.bf16.msra.mxu0 0
    %209 = vmatprep.subr.bf16.mxu0 0
    %210 = vmatpush1.bf16.msra.mxu0 0
    %211 = vmatprep.subr.bf16.mxu0 0
    %212 = vmatpush1.bf16.msra.mxu0 0
    %213 = vmatprep.subr.bf16.mxu0 0
    %214 = vmatpush1.bf16.msra.mxu0 0
    %215 = vmatprep.subr.bf16.mxu0 0
    %216 = vmatpush1.bf16.msra.mxu0 0
    %217 = vmatprep.subr.bf16.mxu0 0
    %218 = vmatpush1.bf16.msra.mxu0 0
    %219 = vmatprep.subr.bf16.mxu0 0
    %220 = vmatpush1.bf16.msra.mxu0 0
    %221 = vmatprep.subr.bf16.mxu0 0
    %222 = vmatpush1.bf16.msra.mxu0 0
    %223 = vmatprep.subr.bf16.mxu0 0
    %224 = vmatpush1.bf16.msra.mxu0 0
    %225 = vmatprep.subr.bf16.mxu0 0
    %226 = vmatpush1.bf16.msra.mxu0 0
    %227 = vmatprep.subr.bf16.mxu0 0
    %228 = vmatpush1.bf16.msra.mxu0 0
    %229 = vmatprep.mubr.bf16.mxu0 0
    %230 = vmatmul.mubr.bf16.gmra.mrb[0].mxu0 %v191
    %v231 = vpop.f32.mrb[0].mxu0
    %v232 = vadd.f32 0.0, %v231
    %v233 = vpop.f32.mrb[0].mxu0
    %v234 = vpop.f32.mrb[0].mxu0
    %v235 = vadd.f32 0.0, %v234
    %v236 = vpop.f32.mrb[0].mxu0
    %237 = vdwg.mxu0
    %v240 = vunpack.c.l.b16 %v133
    %v241 = vunpack.c.h.b16 %v133
    %v242 = vunpack.c.l.b16 %v134
    %v243 = vunpack.c.h.b16 %v134
    %v244 = vpack.c.b16 %v242, %v240
    %v245 = vpack.c.b16 %v243, %v241
    %v272 = vunpack.c.l.b16 %v135
    %v273 = vunpack.c.l.b16 %v136
    %v274 = vunpack.c.l.b16 %v137
    %v275 = vunpack.c.l.b16 %v138
    %v276 = vunpack.c.l.b16 %v139
    %v277 = vunpack.c.l.b16 %v140
    %v278 = vunpack.c.l.b16 %v141
    %v279 = vunpack.c.l.b16 %v142
    %v280 = vunpack.c.l.b16 %v143
    %v281 = vunpack.c.l.b16 %v144
    %v282 = vunpack.c.l.b16 %v145
    %v283 = vunpack.c.l.b16 %v146
    %v284 = vunpack.c.l.b16 %v147
    %v285 = vunpack.c.l.b16 %v148
    %v286 = vunpack.c.l.b16 %v149
    %v287 = vunpack.c.l.b16 %v150
    %v288 = vunpack.c.l.b16 %v151
    %v289 = vunpack.c.l.b16 %v152
    %v290 = vunpack.c.l.b16 %v153
    %v291 = vunpack.c.l.b16 %v154
    %v292 = vunpack.c.l.b16 %v155
    %v293 = vunpack.c.l.b16 %v156
    %v294 = vunpack.c.l.b16 %v157
    %v295 = vunpack.c.l.b16 %v158
    %v296 = vunpack.c.l.b16 %v159
    %v297 = vpack.c.b16 %v273, %v272
    %v298 = vpack.c.b16 %v275, %v274
    %v299 = vpack.c.b16 %v277, %v276
    %v300 = vpack.c.b16 %v279, %v278
    %v301 = vpack.c.b16 %v281, %v280
    %v302 = vpack.c.b16 %v283, %v282
    %v303 = vpack.c.b16 %v285, %v284
    %v304 = vpack.c.b16 %v287, %v286
    %v305 = vpack.c.b16 %v289, %v288
    %v306 = vpack.c.b16 %v291, %v290
    %v307 = vpack.c.b16 %v293, %v292
    %v308 = vpack.c.b16 %v295, %v294
    %v309 = vpack.c.b16 %v296, %v296
    %vm322 = vcmask 588800
    %v324 = vsel %vm322, %v245, 0
    %vm326 = vcmask 1043456
    %v328 = vsel %vm326, %v309, 0
    %330 = vmatprep.subr.bf16.mxu0 0
    %331 = vmatpush1.bf16.msra.mxu0 %v297
    %332 = vmatprep.subr.bf16.mxu0 0
    %333 = vmatpush1.bf16.msra.mxu0 %v298
    %334 = vmatprep.subr.bf16.mxu0 0
    %335 = vmatpush1.bf16.msra.mxu0 %v299
    %336 = vmatprep.subr.bf16.mxu0 0
    %337 = vmatpush1.bf16.msra.mxu0 %v300
    %338 = vmatprep.subr.bf16.mxu0 0
    %339 = vmatpush1.bf16.msra.mxu0 %v301
    %340 = vmatprep.subr.bf16.mxu0 0
    %341 = vmatpush1.bf16.msra.mxu0 %v302
    %342 = vmatprep.subr.bf16.mxu0 0
    %343 = vmatpush1.bf16.msra.mxu0 %v303
    %344 = vmatprep.subr.bf16.mxu0 0
    %345 = vmatpush1.bf16.msra.mxu0 %v304
    %346 = vmatprep.subr.bf16.mxu0 0
    %347 = vmatpush1.bf16.msra.mxu0 %v305
    %348 = vmatprep.subr.bf16.mxu0 0
    %349 = vmatpush1.bf16.msra.mxu0 %v306
    %350 = vmatprep.subr.bf16.mxu0 0
    %351 = vmatpush1.bf16.msra.mxu0 %v307
    %352 = vmatprep.subr.bf16.mxu0 0
    %353 = vmatpush1.bf16.msra.mxu0 %v308
    %354 = vmatprep.subr.bf16.mxu0 0
    %355 = vmatpush1.bf16.msra.mxu0 %v328
    %356 = vmatprep.subr.bf16.mxu0 0
    %357 = vmatpush1.bf16.msra.mxu0 0
    %358 = vmatprep.subr.bf16.mxu0 0
    %359 = vmatpush1.bf16.msra.mxu0 0
    %360 = vmatprep.subr.bf16.mxu0 0
    %361 = vmatpush1.bf16.msra.mxu0 0
    %362 = vmatprep.mubr.bf16.mxu0 %v324
    %363 = vmatmul.mubr.bf16.gmra.mrb[0].mxu0 %v244
    %v364 = vpop.f32.mrb[0].mxu0
    %v365 = vadd.f32 %v232, %v364
    %v366 = vpop.f32.mrb[0].mxu0
    %v367 = vpop.f32.mrb[0].mxu0
    %v368 = vadd.f32 %v235, %v367
    %v369 = vpop.f32.mrb[0].mxu0
    %370 = vdwg.mxu0
    %v371 = vld [vmem:[%s7] sm:$0x1]
    %v373 = vlaneseq
    %v374 = vshrl.u32 %v373, 7
    %v375 = vsub.s32 0, %v374
    %v376 = vrot.slane %v371, %v375
    %v378 = vadd.f32 %v365, %v376
    %v379 = vadd.f32 %v368, %v376
    %v380 = vxor.u32 %v378, 2147483648
    %v381 = vxor.u32 %v379, 2147483648
    %v382 = vmul.f32 %v380, 1.442695
    %v383 = vpow.pop %v382
    %v384 = vmul.f32 %v381, 1.442695
    %v385 = vpow.pop %v384
    %v386 = vadd.f32 %v383, 1.0
    %v387 = vadd.f32 %v385, 1.0
    %v388 = vrcp.pop %v386
    %v389 = vmul.f32 1.0, %v388
    %v390 = vrcp.pop %v387
    %v391 = vmul.f32 1.0, %v390
    %v392 = vld [vmem:[%s0] sm:$0xf]
    %v393 = vld [vmem:[%s0 + $0x4] sm:$0xf]
    %v394 = vunpack.c.l.bf16 %v392
    %v395 = vunpack.c.l.bf16 %v393
    %v396 = vmul.f32 %v394, %v389
    %v397 = vmul.f32 %v395, %v391
    %v398 = vsel %vm189, %v396, 0.0
    %399 = vadd.xlane.f32.xlu0 %v398
    %v400 = vpop.xlane.xlu0 %399
    %v401 = vsel %vm189, %v397, 0.0
    %402 = vadd.xlane.f32.xlu0 %v401
    %v403 = vpop.xlane.xlu0 %402
    %v404 = vxor.u32 %v400, 2147483648
    %v405 = vxor.u32 %v403, 2147483648
    %v406 = vmul.f32 %v404, 1.442695
    %v407 = vpow.pop %v406
    %v408 = vmul.f32 %v405, 1.442695
    %v409 = vpow.pop %v408
    %v410 = vadd.f32 %v407, 1.0
    %v411 = vadd.f32 %v409, 1.0
    %v412 = vrcp.pop %v410
    %v413 = vmul.f32 1.0, %v412
    %v414 = vrcp.pop %v411
    %v415 = vmul.f32 1.0, %v414
    %vm416 = vcmask 7168
    %417 = vst.msk [vmem:[#allocation2] sm:$0xff] %vm416, %v413
    %418 = vst.msk [vmem:[#allocation2 + $0x8] sm:$0xff] %vm416, %v415
    // Predicated region
    $region34: #{tpu_custom_call.1} parent=1 // pred_check
      _
    $region35: #{tpu_custom_call.1} parent=1 // pred_check_branch
      %420 = sbr.rel (0) target = $region37
    $region36: #{tpu_custom_call.1} parent=1 // pred_region
      // Predicated region
      $region38: #{tpu_custom_call.1} parent=36 // pred_check
        _
      $region39: #{tpu_custom_call.1} parent=36 // pred_check_branch
        %422 = sbr.rel (0) target = $region41
      $region40: #{tpu_custom_call.1} parent=36 // pred_region
        // Predicated region
        $region42: #{tpu_custom_call.1} parent=40 // pred_check
          _
        $region43: #{tpu_custom_call.1} parent=40 // pred_check_branch
          %424 = sbr.rel (0) target = $region45
        $region44: #{tpu_custom_call.1} parent=40 // pred_region
          // Predicated region
          $region57: #{tpu_custom_call.1} parent=44 // pred_check
            _
          $region58: #{tpu_custom_call.1} parent=44 // pred_check_branch
            %439 = sbr.rel (0) target = $region60
          $region59: #{tpu_custom_call.1} parent=44 // pred_region
            loop: start=0, step=1, limit=1
            $region61: #{tpu_custom_call.1} parent=59 // loop_pre_header
              _
            $region62: #{tpu_custom_call.1} parent=59 // loop_header
              %s441 = sphi 0, %s445
              %p442 = scmp.ge.s32.totalorder %s441, 1
              %s446 = sphi [#allocation2], [#allocation2]
              %s447 = sphi %s8, %s8
            $region63: #{tpu_custom_call.1} parent=59 // loop_header_branch
              %444 = sbr.rel (%p442) target = $region67
            $region64: #{tpu_custom_call.1} parent=59 // loop_body
              %v448 = vld [vmem:[%s446] sm:$0xff]
              %449 = vst [vmem:[%s447] sm:$0xff] %v448
            $region65: #{tpu_custom_call.1} parent=59 // loop_footer
              %s445 = sadd.s32 1, %s441
            $region66: #{tpu_custom_call.1} parent=59 // loop_footer_branch
              %440 = sbr.rel target = $region62
            $region67: #{tpu_custom_call.1} parent=59 // loop_exit
              _
          $region60: #{tpu_custom_call.1} parent=44 // pred_fallthru
            _
          // Predicated region
          $region68: #{tpu_custom_call.1} parent=44 // pred_check
            _
          $region69: #{tpu_custom_call.1} parent=44 // pred_check_branch
            %451 = sbr.rel target = $region71
          $region70: #{tpu_custom_call.1} parent=44 // pred_region
            _
          $region71: #{tpu_custom_call.1} parent=44 // pred_fallthru
            _
        $region45: #{tpu_custom_call.1} parent=40 // pred_fallthru
          _
        // Predicated region
        $region46: #{tpu_custom_call.1} parent=40 // pred_check
          _
        $region47: #{tpu_custom_call.1} parent=40 // pred_check_branch
          %426 = sbr.rel target = $region49
        $region48: #{tpu_custom_call.1} parent=40 // pred_region
          loop: start=0, step=1, limit=1
          $region50: #{tpu_custom_call.1} parent=48 // loop_pre_header
            _
          $region51: #{tpu_custom_call.1} parent=48 // loop_header
            %s429 = sphi 0, %s433
            %p430 = scmp.ge.s32.totalorder %s429, 1
            %s434 = sphi [#allocation2], [#allocation2]
            %s435 = sphi %s8, %s8
          $region52: #{tpu_custom_call.1} parent=48 // loop_header_branch
            %432 = sbr.rel (%p430) target = $region56
          $region53: #{tpu_custom_call.1} parent=48 // loop_body
            %v436 = vld [vmem:[%s434] sm:$0xff]
            %437 = vst [vmem:[%s435] sm:$0xff] %v436
          $region54: #{tpu_custom_call.1} parent=48 // loop_footer
            %s433 = sadd.s32 1, %s429
          $region55: #{tpu_custom_call.1} parent=48 // loop_footer_branch
            %428 = sbr.rel target = $region51
          $region56: #{tpu_custom_call.1} parent=48 // loop_exit
            _
        $region49: #{tpu_custom_call.1} parent=40 // pred_fallthru
          _
      $region41: #{tpu_custom_call.1} parent=36 // pred_fallthru
        _
      %452 = vnop
    $region37: #{tpu_custom_call.1} parent=1 // pred_fallthru
      _
    // Predicated region
    $region72: #{tpu_custom_call.1} parent=1 // pred_check
      _
    $region73: #{tpu_custom_call.1} parent=1 // pred_check_branch
      %454 = sbr.rel (0) target = $region75
    $region74: #{tpu_custom_call.1} parent=1 // pred_region
      _
    $region75: #{tpu_custom_call.1} parent=1 // pred_fallthru
      _

</llo_original>
